<compile_context>
chip_gen: v6e
topology: v6e:2x2x1
jax: 0.10.0
libtpu: 0.0.40
codegen_flags: <defaults>
</compile_context>

<pallas_src>
import jax
import jax.numpy as jnp
from jax.experimental import pallas as pl
from jax.experimental.pallas import tpu as pltpu

LANE = 128
SUBLANE = 8


def _round_up(x, m):
    return ((x + m - 1) // m) * m


def ddqn_kernel(x_ref, w1_ref, b1_ref, w2_ref, b2_ref, w3_ref, b3_ref, o_ref):
    # obs arrives f32; cast to the MXU dtype in-kernel (no extra HBM pass).
    x = x_ref[...].astype(w1_ref.dtype)
    # Layer 1: Linear + ReLU  (bf16 matmul, f32 accumulate)
    h1 = jnp.dot(x, w1_ref[...], preferred_element_type=jnp.float32)
    h1 = jnp.maximum(h1 + b1_ref[...], 0.0).astype(w2_ref.dtype)
    # Layer 2: Linear + ReLU
    h2 = jnp.dot(h1, w2_ref[...], preferred_element_type=jnp.float32)
    h2 = jnp.maximum(h2 + b2_ref[...], 0.0).astype(w3_ref.dtype)
    # Layer 3: Linear (no activation); output kept at true n_actions width.
    q = jnp.dot(h2, w3_ref[...], preferred_element_type=jnp.float32)
    o_ref[...] = (q + b3_ref[...]).astype(o_ref.dtype)


def prepare_params(params, *, param_dtype=jnp.bfloat16, pad_hidden=True):
    """One-time parameter prep (hoisted out of the per-step hot path).

    * weights -> param_dtype (bf16 default, MXU-native); biases -> f32.
    * optionally zero-pads the hidden dims up to 128 lanes. Numerically exact:
      padded units compute ReLU(0 + 0) = 0 and feed zero weight rows.
    * the n_actions output dim is NOT padded (keeps output writeback minimal).
    """
    w1, b1 = params["w1"], params["b1"]
    w2, b2 = params["w2"], params["b2"]
    w3, b3 = params["w3"], params["b3"]

    if pad_hidden:
        l1, l2 = w1.shape[1], w2.shape[1]
        l1p = _round_up(max(l1, LANE), LANE)
        l2p = _round_up(max(l2, LANE), LANE)
        if l1p != l1:
            w1 = jnp.pad(w1, ((0, 0), (0, l1p - l1)))
            b1 = jnp.pad(b1, ((0, 0), (0, l1p - l1)))
            w2 = jnp.pad(w2, ((0, l1p - l1), (0, 0)))
        if l2p != l2:
            w2 = jnp.pad(w2, ((0, 0), (0, l2p - l2)))
            b2 = jnp.pad(b2, ((0, 0), (0, l2p - l2)))
            w3 = jnp.pad(w3, ((0, l2p - l2), (0, 0)))

    return {
        "w1": w1.astype(param_dtype),
        "b1": b1.astype(jnp.float32),
        "w2": w2.astype(param_dtype),
        "b2": b2.astype(jnp.float32),
        "w3": w3.astype(param_dtype),
        "b3": b3.astype(jnp.float32),
    }


def _pick_batch_tile(B, max_batch_tile):
    # DMA / per-step-overhead bound: biggest tile that still leaves work for
    # both v7x TensorCores (>= 2 steps per TC when B allows). VMEM footprint
    # (weights + double-buffered obs/out tiles) is < 1 MB, far below any
    # generation's limit, so it never constrains the tile.
    if B <= SUBLANE:
        return B  # single block equal to the full dim (always legal)
    return min(max_batch_tile, _round_up(pl.cdiv(B, 4), SUBLANE))


def ddq_network_forward(obs, prepared, *, max_batch_tile=2048):
    """obs: (B, input_dims) float32. prepared: output of prepare_params()."""
    w1, b1 = prepared["w1"], prepared["b1"]
    w2, b2 = prepared["w2"], prepared["b2"]
    w3, b3 = prepared["w3"], prepared["b3"]

    B, input_dims = obs.shape
    l1p, l2p = w1.shape[1], w2.shape[1]
    n_actions = w3.shape[1]

    tb = _pick_batch_tile(B, max_batch_tile)
    grid = (pl.cdiv(B, tb),)  # ragged tail handled by Pallas (rows discarded)

    # Weights/biases: constant index_map -> fetched once, VMEM-resident.
    def const_spec(a):
        return pl.BlockSpec(a.shape, lambda i: (0,) * a.ndim)

    flops = 2 * B * (input_dims * l1p + l1p * l2p + l2p * n_actions)
    bytes_accessed = (
        obs.size * obs.dtype.itemsize
        + sum(a.size * a.dtype.itemsize for a in (w1, b1, w2, b2, w3, b3))
        + B * n_actions * 4
    )

    return pl.pallas_call(
        ddqn_kernel,
        out_shape=jax.ShapeDtypeStruct((B, n_actions), jnp.float32),
        grid_spec=pl.GridSpec(
            grid=grid,
            in_specs=[
                pl.BlockSpec((tb, input_dims), lambda i: (i, 0)),  # obs: batch-tiled
                const_spec(w1), const_spec(b1),
                const_spec(w2), const_spec(b2),
                const_spec(w3), const_spec(b3),
            ],
            out_specs=pl.BlockSpec((tb, n_actions), lambda i: (i, 0)),
        ),
        compiler_params=pltpu.CompilerParams(
            # batch axis is embarrassingly parallel -> megacore sharding on v7x
            dimension_semantics=("parallel",),
        ),
        cost_estimate=pl.CostEstimate(
            flops=flops, transcendentals=0, bytes_accessed=bytes_accessed
        ),
    )(obs, w1, b1, w2, b2, w3, b3)


def init_params(key, input_dims, l1_dims, l2_dims, n_actions):
    """Mirror nn.Linear default init: U(-1/sqrt(fan_in), +1/sqrt(fan_in))."""
    keys = jax.random.split(key, 6)

    def linear(kw, kb, fan_in, fan_out):
        bound = 1.0 / jnp.sqrt(jnp.float32(fan_in))
        w = jax.random.uniform(kw, (fan_in, fan_out), jnp.float32, -bound, bound)
        b = jax.random.uniform(kb, (1, fan_out), jnp.float32, -bound, bound)
        return w, b

    w1, b1 = linear(keys[0], keys[1], input_dims, l1_dims)
    w2, b2 = linear(keys[2], keys[3], l1_dims, l2_dims)
    w3, b3 = linear(keys[4], keys[5], l2_dims, n_actions)
    return {"w1": w1, "b1": b1, "w2": w2, "b2": b2, "w3": w3, "b3": b3}


def reference_forward(obs, params):
    h1 = jnp.maximum(obs @ params["w1"] + params["b1"], 0.0)
    h2 = jnp.maximum(h1 @ params["w2"] + params["b2"], 0.0)
    return h2 @ params["w3"] + params["b3"]


if __name__ == "__main__":
    # Small shapes consistent with the module's forward: obs (batch, input_dims)
    batch, input_dims, l1_dims, l2_dims, n_actions = 8, 16, 64, 32, 4

    key = jax.random.PRNGKey(0)
    k_obs, k_obs2, k_params = jax.random.split(key, 3)
    obs = jax.random.normal(k_obs, (batch, input_dims), jnp.float32)
    params = init_params(k_params, input_dims, l1_dims, l2_dims, n_actions)
    q_ref = reference_forward(obs, params)

    fwd = jax.jit(ddq_network_forward)

    # 1) f32 path: exact-ish match against the reference.
    prep_f32 = prepare_params(params, param_dtype=jnp.float32)
    q_f32 = jax.block_until_ready(fwd(obs, prep_f32))
    assert q_f32.shape == (batch, n_actions)
    assert jnp.allclose(q_f32, q_ref, atol=1e-5, rtol=1e-5)

    # 2) bf16 MXU path (the optimized default): relaxed tolerance.
    prep_bf16 = prepare_params(params)
    q_bf16 = jax.block_until_ready(fwd(obs, prep_bf16))
    assert q_bf16.shape == (batch, n_actions)
    assert jnp.allclose(q_bf16, q_ref, atol=3e-2, rtol=3e-2)

    # 3) Ragged batch (not a multiple of the tile): multi-step grid with a
    #    partial last block, exercising the no-pad / cdiv path.
    obs2 = jax.random.normal(k_obs2, (20, input_dims), jnp.float32)
    q2_ref = reference_forward(obs2, params)
    q2 = jax.block_until_ready(fwd(obs2, prep_f32))
    assert q2.shape == (20, n_actions)
    assert jnp.allclose(q2, q2_ref, atol=1e-5, rtol=1e-5)

    print("KERNEL_OK")
</pallas_src>

<mosaic_0001>
module attributes {stable_mosaic.version = 11 : i64} {
  func.func @ddqn_kernel(%arg0: i32, %arg1: memref<8x16xf32, #tpu.memory_space<vmem>>, %arg2: memref<16x128xf32, #tpu.memory_space<vmem>>, %arg3: memref<1x128xf32, #tpu.memory_space<vmem>>, %arg4: memref<128x128xf32, #tpu.memory_space<vmem>>, %arg5: memref<1x128xf32, #tpu.memory_space<vmem>>, %arg6: memref<128x4xf32, #tpu.memory_space<vmem>>, %arg7: memref<1x4xf32, #tpu.memory_space<vmem>>, %arg8: memref<8x4xf32, #tpu.memory_space<vmem>>) attributes {dimension_semantics = [#tpu.dimension_semantics<parallel>], iteration_bounds = array<i64: 1>, scalar_prefetch = 0 : i64, scratch_operands = 0 : i64, tpu.core_type = #tpu.core_type<tc>, window_params = [{transform_indices = @transform_0, window_bounds = array<i64: 8, 16>}, {pipeline_mode = #tpu.pipeline_mode<synchronous>, transform_indices = @transform_1, window_bounds = array<i64: 16, 128>}, {pipeline_mode = #tpu.pipeline_mode<synchronous>, transform_indices = @transform_2, window_bounds = array<i64: 1, 128>}, {pipeline_mode = #tpu.pipeline_mode<synchronous>, transform_indices = @transform_3, window_bounds = array<i64: 128, 128>}, {pipeline_mode = #tpu.pipeline_mode<synchronous>, transform_indices = @transform_4, window_bounds = array<i64: 1, 128>}, {pipeline_mode = #tpu.pipeline_mode<synchronous>, transform_indices = @transform_5, window_bounds = array<i64: 128, 4>}, {pipeline_mode = #tpu.pipeline_mode<synchronous>, transform_indices = @transform_6, window_bounds = array<i64: 1, 4>}, {transform_indices = @transform_7, window_bounds = array<i64: 8, 4>}]} {
    %c0 = arith.constant 0 : index
    %c0_0 = arith.constant 0 : index
    %0 = vector.load %arg1[%c0, %c0_0] : memref<8x16xf32, #tpu.memory_space<vmem>>, vector<8x16xf32>
    %c0_1 = arith.constant 0 : index
    %c0_2 = arith.constant 0 : index
    %1 = vector.load %arg2[%c0_1, %c0_2] : memref<16x128xf32, #tpu.memory_space<vmem>>, vector<16x128xf32>
    %cst = arith.constant dense<0.000000e+00> : vector<8x128xf32>
    %2 = tpu.matmul %0, %1, %cst {dimension_numbers = #tpu.dot_dimension_numbers<[1], [0], [0], [1], [0, 0, 1, 1], [], []>} : vector<8x16xf32>, vector<16x128xf32>, vector<8x128xf32> -> vector<8x128xf32>
    %c0_3 = arith.constant 0 : index
    %c0_4 = arith.constant 0 : index
    %3 = vector.load %arg3[%c0_3, %c0_4] : memref<1x128xf32, #tpu.memory_space<vmem>>, vector<1x128xf32>
    %4 = vector.broadcast %3 : vector<1x128xf32> to vector<8x128xf32>
    %5 = arith.addf %2, %4 : vector<8x128xf32>
    %cst_5 = arith.constant 0.000000e+00 : f32
    %6 = vector.broadcast %cst_5 : f32 to vector<8x128xf32>
    %7 = arith.maximumf %5, %6 : vector<8x128xf32>
    %c0_6 = arith.constant 0 : index
    %c0_7 = arith.constant 0 : index
    %8 = vector.load %arg4[%c0_6, %c0_7] : memref<128x128xf32, #tpu.memory_space<vmem>>, vector<128x128xf32>
    %cst_8 = arith.constant dense<0.000000e+00> : vector<8x128xf32>
    %9 = tpu.matmul %7, %8, %cst_8 {dimension_numbers = #tpu.dot_dimension_numbers<[1], [0], [0], [1], [0, 0, 1, 1], [], []>} : vector<8x128xf32>, vector<128x128xf32>, vector<8x128xf32> -> vector<8x128xf32>
    %c0_9 = arith.constant 0 : index
    %c0_10 = arith.constant 0 : index
    %10 = vector.load %arg5[%c0_9, %c0_10] : memref<1x128xf32, #tpu.memory_space<vmem>>, vector<1x128xf32>
    %11 = vector.broadcast %10 : vector<1x128xf32> to vector<8x128xf32>
    %12 = arith.addf %9, %11 : vector<8x128xf32>
    %cst_11 = arith.constant 0.000000e+00 : f32
    %13 = vector.broadcast %cst_11 : f32 to vector<8x128xf32>
    %14 = arith.maximumf %12, %13 : vector<8x128xf32>
    %c0_12 = arith.constant 0 : index
    %c0_13 = arith.constant 0 : index
    %15 = vector.load %arg6[%c0_12, %c0_13] : memref<128x4xf32, #tpu.memory_space<vmem>>, vector<128x4xf32>
    %cst_14 = arith.constant dense<0.000000e+00> : vector<8x4xf32>
    %16 = tpu.matmul %14, %15, %cst_14 {dimension_numbers = #tpu.dot_dimension_numbers<[1], [0], [0], [1], [0, 0, 1, 1], [], []>} : vector<8x128xf32>, vector<128x4xf32>, vector<8x4xf32> -> vector<8x4xf32>
    %c0_15 = arith.constant 0 : index
    %c0_16 = arith.constant 0 : index
    %17 = vector.load %arg7[%c0_15, %c0_16] : memref<1x4xf32, #tpu.memory_space<vmem>>, vector<1x4xf32>
    %18 = vector.broadcast %17 : vector<1x4xf32> to vector<8x4xf32>
    %19 = arith.addf %16, %18 : vector<8x4xf32>
    %c0_17 = arith.constant 0 : index
    %c0_18 = arith.constant 0 : index
    %20 = vector.load %arg8[%c0_17, %c0_18] : memref<8x4xf32, #tpu.memory_space<vmem>>, vector<8x4xf32>
    tpu.vector_store %arg8[%c0_17, %c0_18], %19 {strides = array<i32>} : memref<8x4xf32, #tpu.memory_space<vmem>>, vector<8x4xf32>,
    return
  }
  func.func @transform_0(%arg0: i32) -> (i32, i32) {
    %c0_i32 = arith.constant 0 : i32
    %c0_i32_0 = arith.constant 0 : i32
    return %arg0, %c0_i32 : i32, i32
  }
  func.func @transform_1(%arg0: i32) -> (i32, i32) {
    %c0_i32 = arith.constant 0 : i32
    %c0_i32_0 = arith.constant 0 : i32
    %c0_i32_1 = arith.constant 0 : i32
    return %c0_i32, %c0_i32_0 : i32, i32
  }
  func.func @transform_2(%arg0: i32) -> (i32, i32) {
    %c0_i32 = arith.constant 0 : i32
    %c0_i32_0 = arith.constant 0 : i32
    %c0_i32_1 = arith.constant 0 : i32
    return %c0_i32, %c0_i32_0 : i32, i32
  }
  func.func @transform_3(%arg0: i32) -> (i32, i32) {
    %c0_i32 = arith.constant 0 : i32
    %c0_i32_0 = arith.constant 0 : i32
    %c0_i32_1 = arith.constant 0 : i32
    return %c0_i32, %c0_i32_0 : i32, i32
  }
  func.func @transform_4(%arg0: i32) -> (i32, i32) {
    %c0_i32 = arith.constant 0 : i32
    %c0_i32_0 = arith.constant 0 : i32
    %c0_i32_1 = arith.constant 0 : i32
    return %c0_i32, %c0_i32_0 : i32, i32
  }
  func.func @transform_5(%arg0: i32) -> (i32, i32) {
    %c0_i32 = arith.constant 0 : i32
    %c0_i32_0 = arith.constant 0 : i32
    %c0_i32_1 = arith.constant 0 : i32
    return %c0_i32, %c0_i32_0 : i32, i32
  }
  func.func @transform_6(%arg0: i32) -> (i32, i32) {
    %c0_i32 = arith.constant 0 : i32
    %c0_i32_0 = arith.constant 0 : i32
    %c0_i32_1 = arith.constant 0 : i32
    return %c0_i32, %c0_i32_0 : i32, i32
  }
  func.func @transform_7(%arg0: i32) -> (i32, i32) {
    %c0_i32 = arith.constant 0 : i32
    %c0_i32_0 = arith.constant 0 : i32
    return %arg0, %c0_i32 : i32, i32
  }
}

</mosaic_0001>

<llo_original>
// kernel: ddq_network_forward.1
$region0: #{ddq_network_forward.1}
  #allocation0 [shape = 'u32[]', space=smem, size = 0x4, offset = 0x4, fixed_abs, tag = 'smem constant byte address 0x4 - core index']
  #allocation1 [shape = 'u32[144,128]{1,0:T(1,128)}', space=vmem, size = 0x12000, scoped, tag = 'internal scratch']
  %s0 = inlined_call_operand.vmem [shape: f32[8,16], index: 0, kind: input, shape index: {}]
  %s1 = inlined_call_operand.hbm [shape: f32[16,128], index: 1, kind: input, shape index: {}]
  %s2 = inlined_call_operand.vmem [shape: f32[1,128], index: 2, kind: input, shape index: {}]
  %s3 = inlined_call_operand.vmem [shape: f32[128,128], index: 3, kind: input, shape index: {}]
  %s4 = inlined_call_operand.vmem [shape: f32[1,128], index: 4, kind: input, shape index: {}]
  %s5 = inlined_call_operand.vmem [shape: f32[128,4], index: 5, kind: input, shape index: {}]
  %s6 = inlined_call_operand.hbm [shape: f32[1,4], index: 6, kind: input, shape index: {}]
  %s7 = inlined_call_operand.vmem [shape: f32[8,4], index: 7, kind: output, shape index: {}]
  %s8 = sld [smem:[#allocation0]]
  $region46: #{ddq_network_forward.1} parent=0
    _
  %s10 = ssub.s32 1, %s8
  %s11 = scalar_select 0, %s10, %s8
  $region1: #{ddq_network_forward.1} parent=0
    #allocation2 [shape = 'u8[8192]{0}', space=vmem, size = 0x2000, scoped, tag = 'input window, operand 1, single buffered']
    #allocation3 [shape = 's32[1]{0}', space=sflag, size = 0x4, scoped, tag = 'scoped memory for ddq_network_forward.1']
    #allocation4 [shape = 'u8[512]{0}', space=vmem, size = 0x400, scoped, tag = 'input window, operand 6, single buffered']
    #allocation5 [shape = 's32[1]{0}', space=sflag, size = 0x4, scoped, tag = 'scoped memory for ddq_network_forward.1']
    %12 = vsyncpa [#allocation3], 0
    %13 = vsyncpa [#allocation5], 0
    // Predicated region
    $region2: #{ddq_network_forward.1} parent=1 // pred_check
      _
    $region3: #{ddq_network_forward.1} parent=1 // pred_check_branch
      %15 = sbr.rel (0) target = $region5
    $region4: #{ddq_network_forward.1} parent=1 // pred_region
      _
    $region5: #{ddq_network_forward.1} parent=1 // pred_fallthru
      _
    // Predicated region
    $region6: #{ddq_network_forward.1} parent=1 // pred_check
      _
    $region7: #{ddq_network_forward.1} parent=1 // pred_check_branch
      %17 = sbr.rel (0) target = $region9
    $region8: #{ddq_network_forward.1} parent=1 // pred_region
      %s19 = ssub.s32 256, 256
      %20 = vsyncadd [#allocation3], %s19
      %s21 = sshll.u32 [#allocation2], 4
      %s22 = int_to_ptr.vmem [resolvable:$true] %s21
      %27 = dma.hbm_to_vmem [thread:$0]  %s1, 256, %s22, [#allocation3], 128, 128, 8
    $region9: #{ddq_network_forward.1} parent=1 // pred_fallthru
      _
    // Predicated region
    $region10: #{ddq_network_forward.1} parent=1 // pred_check
      _
    $region11: #{ddq_network_forward.1} parent=1 // pred_check_branch
      %29 = sbr.rel (0) target = $region13
    $region12: #{ddq_network_forward.1} parent=1 // pred_region
      _
    $region13: #{ddq_network_forward.1} parent=1 // pred_fallthru
      _
    // Predicated region
    $region14: #{ddq_network_forward.1} parent=1 // pred_check
      _
    $region15: #{ddq_network_forward.1} parent=1 // pred_check_branch
      %31 = sbr.rel (0) target = $region17
    $region16: #{ddq_network_forward.1} parent=1 // pred_region
      _
    $region17: #{ddq_network_forward.1} parent=1 // pred_fallthru
      _
    // Predicated region
    $region18: #{ddq_network_forward.1} parent=1 // pred_check
      _
    $region19: #{ddq_network_forward.1} parent=1 // pred_check_branch
      %33 = sbr.rel (0) target = $region21
    $region20: #{ddq_network_forward.1} parent=1 // pred_region
      _
    $region21: #{ddq_network_forward.1} parent=1 // pred_fallthru
      _
    // Predicated region
    $region22: #{ddq_network_forward.1} parent=1 // pred_check
      _
    $region23: #{ddq_network_forward.1} parent=1 // pred_check_branch
      %35 = sbr.rel (0) target = $region25
    $region24: #{ddq_network_forward.1} parent=1 // pred_region
      _
    $region25: #{ddq_network_forward.1} parent=1 // pred_fallthru
      _
    // Predicated region
    $region26: #{ddq_network_forward.1} parent=1 // pred_check
      _
    $region27: #{ddq_network_forward.1} parent=1 // pred_check_branch
      %37 = sbr.rel (0) target = $region29
    $region28: #{ddq_network_forward.1} parent=1 // pred_region
      %s39 = ssub.s32 16, 16
      %40 = vsyncadd [#allocation5], %s39
      %s42 = sshll.u32 [#allocation4], 4
      %s43 = int_to_ptr.vmem [resolvable:$true] %s42
      %45 = dma.hbm_to_vmem [thread:$0]  %s6, 16, %s43, [#allocation5]
    $region29: #{ddq_network_forward.1} parent=1 // pred_fallthru
      _
    // Predicated region
    $region30: #{ddq_network_forward.1} parent=1 // pred_check
      _
    $region31: #{ddq_network_forward.1} parent=1 // pred_check_branch
      %47 = sbr.rel (0) target = $region33
    $region32: #{ddq_network_forward.1} parent=1 // pred_region
      %48 = dma.done [#allocation3], 256
    $region33: #{ddq_network_forward.1} parent=1 // pred_fallthru
      _
    // Predicated region
    $region34: #{ddq_network_forward.1} parent=1 // pred_check
      _
    $region35: #{ddq_network_forward.1} parent=1 // pred_check_branch
      %50 = sbr.rel (0) target = $region37
    $region36: #{ddq_network_forward.1} parent=1 // pred_region
      %51 = dma.done [#allocation5], 16
    $region37: #{ddq_network_forward.1} parent=1 // pred_fallthru
      _
    %v52 = vld [vmem:[%s0] sm:$0xff]
    %v53 = vld [vmem:[#allocation2] sm:$0xff]
    %v54 = vld [vmem:[#allocation2 + $0x8] sm:$0xff]
    %v55 = vld [vmem:[%s2] sm:$0x1]
    %v57 = vlaneseq
    %v58 = vshrl.u32 %v57, 7
    %v59 = vsub.s32 0, %v58
    %v60 = vrot.slane %v55, %v59
    %vm62 = vcmask 130048
    %v64 = vsel %vm62, %v52, 0
    %66 = vmatprep.subr.mxu0 0.0
    %67 = vmatpush1.msra.mxu0 0.0
    %68 = vmatprep.subr.mxu0 0.0
    %69 = vmatpush1.msra.mxu0 0.0
    %70 = vmatprep.subr.mxu0 0.0
    %71 = vmatpush1.msra.mxu0 0.0
    %72 = vmatprep.subr.mxu0 0.0
    %73 = vmatpush1.msra.mxu0 0.0
    %74 = vmatprep.subr.mxu0 0.0
    %75 = vmatpush1.msra.mxu0 0.0
    %76 = vmatprep.subr.mxu0 0.0
    %77 = vmatpush1.msra.mxu0 0.0
    %78 = vmatprep.subr.mxu0 0.0
    %79 = vmatpush1.msra.mxu0 0.0
    %80 = vmatprep.subr.mxu0 0.0
    %81 = vmatpush1.msra.mxu0 0.0
    %82 = vmatprep.subr.mxu0 0.0
    %83 = vmatpush1.msra.mxu0 0.0
    %84 = vmatprep.subr.mxu0 0.0
    %85 = vmatpush1.msra.mxu0 0.0
    %86 = vmatprep.subr.mxu0 0.0
    %87 = vmatpush1.msra.mxu0 0.0
    %88 = vmatprep.subr.mxu0 0.0
    %89 = vmatpush1.msra.mxu0 0.0
    %90 = vmatprep.subr.mxu0 0.0
    %91 = vmatpush1.msra.mxu0 0.0
    %92 = vmatprep.subr.mxu0 0.0
    %93 = vmatpush1.msra.mxu0 0.0
    %94 = vmatprep.subr.mxu0 0.0
    %95 = vmatpush1.msra.mxu0 %v54
    %96 = vmatprep.subr.mxu0 0.0
    %97 = vmatpush1.msra.mxu0 %v53
    %98 = vmatprep.subr.mxu0 0.0
    %99 = vmatpush2.msra.mxu0 0.0
    %100 = vmatprep.subr.mxu0 0.0
    %101 = vmatpush2.msra.mxu0 0.0
    %102 = vmatprep.subr.mxu0 0.0
    %103 = vmatpush2.msra.mxu0 0.0
    %104 = vmatprep.subr.mxu0 0.0
    %105 = vmatpush2.msra.mxu0 0.0
    %106 = vmatprep.subr.mxu0 0.0
    %107 = vmatpush2.msra.mxu0 0.0
    %108 = vmatprep.subr.mxu0 0.0
    %109 = vmatpush2.msra.mxu0 0.0
    %110 = vmatprep.subr.mxu0 0.0
    %111 = vmatpush2.msra.mxu0 0.0
    %112 = vmatprep.subr.mxu0 0.0
    %113 = vmatpush2.msra.mxu0 0.0
    %114 = vmatprep.subr.mxu0 0.0
    %115 = vmatpush2.msra.mxu0 0.0
    %116 = vmatprep.subr.mxu0 0.0
    %117 = vmatpush2.msra.mxu0 0.0
    %118 = vmatprep.subr.mxu0 0.0
    %119 = vmatpush2.msra.mxu0 0.0
    %120 = vmatprep.subr.mxu0 0.0
    %121 = vmatpush2.msra.mxu0 0.0
    %122 = vmatprep.subr.mxu0 0.0
    %123 = vmatpush2.msra.mxu0 0.0
    %124 = vmatprep.subr.mxu0 0.0
    %125 = vmatpush2.msra.mxu0 0.0
    %126 = vmatprep.subr.mxu0 0.0
    %127 = vmatpush2.msra.mxu0 0.0
    %128 = vmatprep.subr.mxu0 0.0
    %129 = vmatpush2.msra.mxu0 0.0
    %130 = vmatprep.mubr.f32.mxu0 0.0
    %131 = vmatmul.mubr.f32.gmra.mxu0 %v64
    %v132 = vpop.f32.mrf.mxu0
    %v133 = vadd.f32 %v60, %v132
    %v134 = vpop.f32.mrf.mxu0
    %135 = vdwg.mxu0
    %v136 = vmax.f32 %v133, 0.0
    %v137 = vld [vmem:[%s3] sm:$0xff]
    %v138 = vld [vmem:[%s3 + $0x8] sm:$0xff]
    %v139 = vld [vmem:[%s3 + $0x10] sm:$0xff]
    %v140 = vld [vmem:[%s3 + $0x18] sm:$0xff]
    %v141 = vld [vmem:[%s3 + $0x20] sm:$0xff]
    %v142 = vld [vmem:[%s3 + $0x28] sm:$0xff]
    %v143 = vld [vmem:[%s3 + $0x30] sm:$0xff]
    %v144 = vld [vmem:[%s3 + $0x38] sm:$0xff]
    %v145 = vld [vmem:[%s3 + $0x40] sm:$0xff]
    %v146 = vld [vmem:[%s3 + $0x48] sm:$0xff]
    %v147 = vld [vmem:[%s3 + $0x50] sm:$0xff]
    %v148 = vld [vmem:[%s3 + $0x58] sm:$0xff]
    %v149 = vld [vmem:[%s3 + $0x60] sm:$0xff]
    %v150 = vld [vmem:[%s3 + $0x68] sm:$0xff]
    %v151 = vld [vmem:[%s3 + $0x70] sm:$0xff]
    %v152 = vld [vmem:[%s3 + $0x78] sm:$0xff]
    %v153 = vld [vmem:[%s4] sm:$0x1]
    %v155 = vlaneseq
    %v156 = vshrl.u32 %v155, 7
    %v157 = vsub.s32 0, %v156
    %v158 = vrot.slane %v153, %v157
    %160 = vmatprep.subr.mxu0 0.0
    %161 = vmatpush1.msra.mxu0 %v152
    %162 = vmatprep.subr.mxu0 0.0
    %163 = vmatpush1.msra.mxu0 %v151
    %164 = vmatprep.subr.mxu0 0.0
    %165 = vmatpush1.msra.mxu0 %v150
    %166 = vmatprep.subr.mxu0 0.0
    %167 = vmatpush1.msra.mxu0 %v149
    %168 = vmatprep.subr.mxu0 0.0
    %169 = vmatpush1.msra.mxu0 %v148
    %170 = vmatprep.subr.mxu0 0.0
    %171 = vmatpush1.msra.mxu0 %v147
    %172 = vmatprep.subr.mxu0 0.0
    %173 = vmatpush1.msra.mxu0 %v146
    %174 = vmatprep.subr.mxu0 0.0
    %175 = vmatpush1.msra.mxu0 %v145
    %176 = vmatprep.subr.mxu0 0.0
    %177 = vmatpush1.msra.mxu0 %v144
    %178 = vmatprep.subr.mxu0 0.0
    %179 = vmatpush1.msra.mxu0 %v143
    %180 = vmatprep.subr.mxu0 0.0
    %181 = vmatpush1.msra.mxu0 %v142
    %182 = vmatprep.subr.mxu0 0.0
    %183 = vmatpush1.msra.mxu0 %v141
    %184 = vmatprep.subr.mxu0 0.0
    %185 = vmatpush1.msra.mxu0 %v140
    %186 = vmatprep.subr.mxu0 0.0
    %187 = vmatpush1.msra.mxu0 %v139
    %188 = vmatprep.subr.mxu0 0.0
    %189 = vmatpush1.msra.mxu0 %v138
    %190 = vmatprep.subr.mxu0 0.0
    %191 = vmatpush1.msra.mxu0 %v137
    %192 = vmatprep.subr.mxu0 0.0
    %193 = vmatpush2.msra.mxu0 0.0
    %194 = vmatprep.subr.mxu0 0.0
    %195 = vmatpush2.msra.mxu0 0.0
    %196 = vmatprep.subr.mxu0 0.0
    %197 = vmatpush2.msra.mxu0 0.0
    %198 = vmatprep.subr.mxu0 0.0
    %199 = vmatpush2.msra.mxu0 0.0
    %200 = vmatprep.subr.mxu0 0.0
    %201 = vmatpush2.msra.mxu0 0.0
    %202 = vmatprep.subr.mxu0 0.0
    %203 = vmatpush2.msra.mxu0 0.0
    %204 = vmatprep.subr.mxu0 0.0
    %205 = vmatpush2.msra.mxu0 0.0
    %206 = vmatprep.subr.mxu0 0.0
    %207 = vmatpush2.msra.mxu0 0.0
    %208 = vmatprep.subr.mxu0 0.0
    %209 = vmatpush2.msra.mxu0 0.0
    %210 = vmatprep.subr.mxu0 0.0
    %211 = vmatpush2.msra.mxu0 0.0
    %212 = vmatprep.subr.mxu0 0.0
    %213 = vmatpush2.msra.mxu0 0.0
    %214 = vmatprep.subr.mxu0 0.0
    %215 = vmatpush2.msra.mxu0 0.0
    %216 = vmatprep.subr.mxu0 0.0
    %217 = vmatpush2.msra.mxu0 0.0
    %218 = vmatprep.subr.mxu0 0.0
    %219 = vmatpush2.msra.mxu0 0.0
    %220 = vmatprep.subr.mxu0 0.0
    %221 = vmatpush2.msra.mxu0 0.0
    %222 = vmatprep.subr.mxu0 0.0
    %223 = vmatpush2.msra.mxu0 0.0
    %224 = vmatprep.mubr.f32.mxu0 0.0
    %225 = vmatmul.mubr.f32.gmra.mxu0 %v136
    %v226 = vpop.f32.mrf.mxu0
    %v227 = vadd.f32 %v158, %v226
    %v228 = vpop.f32.mrf.mxu0
    %229 = vdwg.mxu0
    %v230 = vmax.f32 %v227, 0.0
    %v231 = vld [vmem:[%s5] sm:$0xff]
    %v232 = vld [vmem:[%s5 + $0x8] sm:$0xff]
    %v233 = vld [vmem:[%s5 + $0x10] sm:$0xff]
    %v234 = vld [vmem:[%s5 + $0x18] sm:$0xff]
    %v235 = vld [vmem:[%s5 + $0x20] sm:$0xff]
    %v236 = vld [vmem:[%s5 + $0x28] sm:$0xff]
    %v237 = vld [vmem:[%s5 + $0x30] sm:$0xff]
    %v238 = vld [vmem:[%s5 + $0x38] sm:$0xff]
    %v239 = vld [vmem:[%s5 + $0x40] sm:$0xff]
    %v240 = vld [vmem:[%s5 + $0x48] sm:$0xff]
    %v241 = vld [vmem:[%s5 + $0x50] sm:$0xff]
    %v242 = vld [vmem:[%s5 + $0x58] sm:$0xff]
    %v243 = vld [vmem:[%s5 + $0x60] sm:$0xff]
    %v244 = vld [vmem:[%s5 + $0x68] sm:$0xff]
    %v245 = vld [vmem:[%s5 + $0x70] sm:$0xff]
    %v246 = vld [vmem:[%s5 + $0x78] sm:$0xff]
    %v247 = vld [vmem:[#allocation4] sm:$0x1]
    %v249 = vlaneseq
    %v250 = vshrl.u32 %v249, 7
    %v251 = vsub.s32 0, %v250
    %v252 = vrot.slane %v247, %v251
    %254 = vmatprep.subr.mxu0 0.0
    %255 = vmatpush1.msra.mxu0 %v246
    %256 = vmatprep.subr.mxu0 0.0
    %257 = vmatpush1.msra.mxu0 %v245
    %258 = vmatprep.subr.mxu0 0.0
    %259 = vmatpush1.msra.mxu0 %v244
    %260 = vmatprep.subr.mxu0 0.0
    %261 = vmatpush1.msra.mxu0 %v243
    %262 = vmatprep.subr.mxu0 0.0
    %263 = vmatpush1.msra.mxu0 %v242
    %264 = vmatprep.subr.mxu0 0.0
    %265 = vmatpush1.msra.mxu0 %v241
    %266 = vmatprep.subr.mxu0 0.0
    %267 = vmatpush1.msra.mxu0 %v240
    %268 = vmatprep.subr.mxu0 0.0
    %269 = vmatpush1.msra.mxu0 %v239
    %270 = vmatprep.subr.mxu0 0.0
    %271 = vmatpush1.msra.mxu0 %v238
    %272 = vmatprep.subr.mxu0 0.0
    %273 = vmatpush1.msra.mxu0 %v237
    %274 = vmatprep.subr.mxu0 0.0
    %275 = vmatpush1.msra.mxu0 %v236
    %276 = vmatprep.subr.mxu0 0.0
    %277 = vmatpush1.msra.mxu0 %v235
    %278 = vmatprep.subr.mxu0 0.0
    %279 = vmatpush1.msra.mxu0 %v234
    %280 = vmatprep.subr.mxu0 0.0
    %281 = vmatpush1.msra.mxu0 %v233
    %282 = vmatprep.subr.mxu0 0.0
    %283 = vmatpush1.msra.mxu0 %v232
    %284 = vmatprep.subr.mxu0 0.0
    %285 = vmatpush1.msra.mxu0 %v231
    %286 = vmatprep.subr.mxu0 0.0
    %287 = vmatpush2.msra.mxu0 0.0
    %288 = vmatprep.subr.mxu0 0.0
    %289 = vmatpush2.msra.mxu0 0.0
    %290 = vmatprep.subr.mxu0 0.0
    %291 = vmatpush2.msra.mxu0 0.0
    %292 = vmatprep.subr.mxu0 0.0
    %293 = vmatpush2.msra.mxu0 0.0
    %294 = vmatprep.subr.mxu0 0.0
    %295 = vmatpush2.msra.mxu0 0.0
    %296 = vmatprep.subr.mxu0 0.0
    %297 = vmatpush2.msra.mxu0 0.0
    %298 = vmatprep.subr.mxu0 0.0
    %299 = vmatpush2.msra.mxu0 0.0
    %300 = vmatprep.subr.mxu0 0.0
    %301 = vmatpush2.msra.mxu0 0.0
    %302 = vmatprep.subr.mxu0 0.0
    %303 = vmatpush2.msra.mxu0 0.0
    %304 = vmatprep.subr.mxu0 0.0
    %305 = vmatpush2.msra.mxu0 0.0
    %306 = vmatprep.subr.mxu0 0.0
    %307 = vmatpush2.msra.mxu0 0.0
    %308 = vmatprep.subr.mxu0 0.0
    %309 = vmatpush2.msra.mxu0 0.0
    %310 = vmatprep.subr.mxu0 0.0
    %311 = vmatpush2.msra.mxu0 0.0
    %312 = vmatprep.subr.mxu0 0.0
    %313 = vmatpush2.msra.mxu0 0.0
    %314 = vmatprep.subr.mxu0 0.0
    %315 = vmatpush2.msra.mxu0 0.0
    %316 = vmatprep.subr.mxu0 0.0
    %317 = vmatpush2.msra.mxu0 0.0
    %318 = vmatprep.mubr.f32.mxu0 0.0
    %319 = vmatmul.mubr.f32.gmra.mxu0 %v230
    %v320 = vpop.f32.mrf.mxu0
    %v321 = vadd.f32 %v252, %v320
    %v322 = vpop.f32.mrf.mxu0
    %323 = vdwg.mxu0
    %vm324 = vcmask 31744
    %325 = vst.msk [vmem:[%s7] sm:$0xff] %vm324, %v321
    // Predicated region
    $region38: #{ddq_network_forward.1} parent=1 // pred_check
      _
    $region39: #{ddq_network_forward.1} parent=1 // pred_check_branch
      %327 = sbr.rel (0) target = $region41
    $region40: #{ddq_network_forward.1} parent=1 // pred_region
      _
    $region41: #{ddq_network_forward.1} parent=1 // pred_fallthru
      _
    // Predicated region
    $region42: #{ddq_network_forward.1} parent=1 // pred_check
      _
    $region43: #{ddq_network_forward.1} parent=1 // pred_check_branch
      %329 = sbr.rel (0) target = $region45
    $region44: #{ddq_network_forward.1} parent=1 // pred_region
      _
    $region45: #{ddq_network_forward.1} parent=1 // pred_fallthru
      _
    %330 = vsyncpa [#allocation3], 1
    %331 = vsyncpa [#allocation5], 1

</llo_original>
